<compile_context>
chip_gen: v7x
topology: tpu7x:2x2x1
jax: 0.10.0
libtpu: 0.0.40
codegen_flags: <defaults>
</compile_context>

<pallas_src>
import jax
import jax.numpy as jnp
from jax.experimental import pallas as pl
from jax.experimental.pallas import tpu as pltpu

_W_CHOICES = (512, 256, 128)          # lane-dense slab widths (multiples of 128)
_STRIP_ROWS = 128                     # in-kernel streaming strip (sublane aligned)
_MAX_BLOCK_BYTES = 4 * 1024 * 1024    # target HBM bytes per input block
_MAX_BLOCK_ROWS = 4096                # hard cap (bounds unrolled strips at 32)
_VMEM_LIMIT = 32 * 1024 * 1024        # 2x(in+out) 4 MiB blocks + slack; OK on all chips


def _round_up(x: int, m: int) -> int:
    return ((x + m - 1) // m) * m


def _make_confidence_kernel(rows, w, tile_rows, steps, strip_rows, acc_rows,
                            needs_mask):
    """Build the kernel body for one static tiling configuration."""
    tiny = acc_rows != 8                       # single sub-(8,·) block (rows <= 8)
    num_strips = 1 if tiny else tile_rows // strip_rows

    def kernel(x_ref, probs_ref, conf_ref):
        p = pl.program_id(0)
        i = pl.program_id(1)

        # conf_ref is a per-core resident accumulator: its output block index
        # is constant along the trailing "arbitrary" grid axis.
        @pl.when(i == 0)
        def _init():
            conf_ref[...] = jnp.zeros_like(conf_ref)

        if tiny:
            x = x_ref[...].astype(jnp.float32)
            probs = jax.nn.sigmoid(x)
            probs_ref[...] = probs.astype(probs_ref.dtype)
            conf_ref[...] += jnp.abs(probs - 0.5) * 2.0
            return

        # Unclamped global row offset of this grid slot.  Duplicate slots
        # produced by grid rounding (index_map clamps them to the last block)
        # have row0 >= rows and are therefore fully masked out of the sum.
        row0 = (p * steps + i) * tile_rows

        acc = jnp.zeros((8, w), jnp.float32)
        for s in range(num_strips):            # static full unroll
            r = s * strip_rows
            x = x_ref[pl.ds(r, strip_rows), :].astype(jnp.float32)
            probs = jax.nn.sigmoid(x)                           # EUP/VPU
            probs_ref[pl.ds(r, strip_rows), :] = probs.astype(probs_ref.dtype)
            conf = jnp.abs(probs - 0.5) * 2.0                   # VPU
            if needs_mask:
                # Zero out rows past the true end of the array (ragged last
                # block / duplicated slot); clipped-DMA garbage (possibly NaN)
                # is select-ed away, never multiplied.
                ridx = jax.lax.broadcasted_iota(jnp.int32, (strip_rows, w), 0)
                conf = jnp.where(row0 + r + ridx < rows, conf, 0.0)
            # Fold whole 8-row groups with pure VPU adds (no XLU in the loop).
            acc = acc + conf.reshape(strip_rows // 8, 8, w).sum(axis=0)

        conf_ref[...] += acc

    return kernel


def calculate_confidence(output_logits: jax.Array):
    """Pallas equivalent of BaseModel.calculate_confidence (+ sigmoid preds).

    Returns (probabilities in the input dtype / shape, confidence scalar f32).
    """
    orig_shape = output_logits.shape
    orig_dtype = output_logits.dtype
    total = int(output_logits.size)

    flat = output_logits.reshape(-1)           # contiguous -> free

    w = next((c for c in _W_CHOICES if total and total % c == 0), None)
    if w is None:
        # TODO(synk): totals not divisible by 128 cannot form a lane-dense 2-D
        # view without a pad copy; those (rare) shapes fall back to plain XLA
        # instead of paying 2-3x extra HBM traffic for pad/unpad passes.
        probs = jax.nn.sigmoid(flat.astype(jnp.float32))
        conf = (jnp.mean(jnp.abs(probs - 0.5) * 2.0)
                if total else jnp.zeros((), jnp.float32))
        return probs.astype(orig_dtype).reshape(orig_shape), conf

    rows = total // w
    x2d = flat.reshape(rows, w)                # contiguous -> free

    itemsize = jnp.dtype(orig_dtype).itemsize
    max_rows = min(_MAX_BLOCK_ROWS,
                   max(_STRIP_ROWS,
                       (_MAX_BLOCK_BYTES // (w * itemsize))
                       // _STRIP_ROWS * _STRIP_ROWS))

    if rows <= 8:
        tile_rows, n_blocks, strip_rows = rows, 1, rows
    else:
        gran = _STRIP_ROWS if rows >= _STRIP_ROWS else 8
        # Enough blocks to (a) stay under the per-block byte budget, (b) feed
        # both TensorCores, (c) leave a few steps/core for DMA-compute overlap.
        n_target = max(2, pl.cdiv(rows, max_rows), min(8, rows // 1024))
        n_target = _round_up(n_target, 2)
        tile_rows = min(max_rows, _round_up(pl.cdiv(rows, n_target), gran))
        n_blocks = pl.cdiv(rows, tile_rows)
        strip_rows = _STRIP_ROWS if tile_rows % _STRIP_ROWS == 0 else tile_rows

    num_par = 2 if n_blocks >= 2 else 1        # v7x megacore; serial elsewhere
    steps = pl.cdiv(n_blocks, num_par)
    needs_mask = num_par * steps * tile_rows != rows
    acc_rows = 8 if (tile_rows >= 8 and tile_rows % 8 == 0) else tile_rows
    last_block = n_blocks - 1

    def data_index(p, i):
        # Clamp so grid slots rounded past the end re-visit the last block:
        # their confidence contribution is masked to zero in the kernel and
        # their probs write-back is an idempotent rewrite.  No OOB DMA ever.
        return (jnp.minimum(p * steps + i, last_block), 0)

    kernel = _make_confidence_kernel(rows, w, tile_rows, steps, strip_rows,
                                     acc_rows, needs_mask)

    probs2d, conf_partials = pl.pallas_call(
        kernel,
        out_shape=(
            jax.ShapeDtypeStruct((rows, w), orig_dtype),              # probs
            jax.ShapeDtypeStruct((num_par * acc_rows, w), jnp.float32),
        ),
        grid_spec=pltpu.PrefetchScalarGridSpec(
            num_scalar_prefetch=0,
            grid=(num_par, steps),
            in_specs=[pl.BlockSpec((tile_rows, w), data_index)],
            out_specs=[
                pl.BlockSpec((tile_rows, w), data_index),
                pl.BlockSpec((acc_rows, w), lambda p, i: (p, 0)),
            ],
        ),
        compiler_params=pltpu.CompilerParams(
            dimension_semantics=("parallel", "arbitrary"),
            vmem_limit_bytes=_VMEM_LIMIT,
        ),
        cost_estimate=pl.CostEstimate(
            flops=5 * total,
            transcendentals=total,
            bytes_accessed=2 * total * itemsize + num_par * acc_rows * w * 4,
        ),
    )(x2d)

    probs = probs2d.reshape(orig_shape)        # contiguous -> free
    confidence = conf_partials.sum() / jnp.float32(total)
    return probs, confidence


def _reference(output_logits):
    p = jax.nn.sigmoid(output_logits.astype(jnp.float32))
    return p, jnp.mean(jnp.abs(p - 0.5) * 2.0)


if __name__ == "__main__":
    k1, k2, k3 = jax.random.split(jax.random.PRNGKey(0), 3)

    # Small NCHW "model output" consistent with a conv-style BaseModel subclass.
    x = jax.random.normal(k1, (2, 4, 16, 16), dtype=jnp.float32)
    probs, conf = calculate_confidence(x)
    jax.block_until_ready((probs, conf))
    ref_probs, ref_conf = _reference(x)
    assert probs.shape == x.shape and probs.dtype == x.dtype
    assert jnp.allclose(probs, ref_probs, atol=1e-5, rtol=1e-5)
    assert jnp.allclose(conf, ref_conf, atol=1e-5, rtol=1e-5)

    # Larger bf16 case: zero-copy (no pad) path, multi-step grid, 2-way
    # TensorCore split, strip loop, dtype-matched probability writeback.
    y = jax.random.normal(k2, (4, 4, 384, 384), dtype=jnp.bfloat16)
    probs2, conf2 = calculate_confidence(y)
    jax.block_until_ready((probs2, conf2))
    ref_probs2, ref_conf2 = _reference(y)
    assert probs2.dtype == jnp.bfloat16
    assert jnp.allclose(
        probs2.astype(jnp.float32),
        ref_probs2.astype(jnp.bfloat16).astype(jnp.float32),
        atol=1e-2, rtol=5e-2,
    )
    assert jnp.allclose(conf2, ref_conf2, atol=1e-3, rtol=1e-3)

    # Awkward shape: W=256 slab, rows (75) not a multiple of the tile (40),
    # exercising the in-kernel ragged-edge mask and clipped output stores
    # (no padding copies in the wrapper).
    z = jax.random.normal(k3, (3, 5, 40, 32), dtype=jnp.float32)
    probs3, conf3 = calculate_confidence(z)
    jax.block_until_ready((probs3, conf3))
    ref_probs3, ref_conf3 = _reference(z)
    assert jnp.allclose(probs3, ref_probs3, atol=1e-5, rtol=1e-5)
    assert jnp.allclose(conf3, ref_conf3, atol=1e-5, rtol=1e-5)

    # TODO(synk): forward() and predict() are @abstractmethod in BaseModel —
    # no concrete network to translate; only calculate_confidence has compute.
    print("KERNEL_OK")
</pallas_src>

<mosaic_0001>
module attributes {stable_mosaic.version = 11 : i64} {
  func.func @kernel(%arg0: i32, %arg1: i32, %arg2: memref<4x512xf32, #tpu.memory_space<vmem>>, %arg3: memref<4x512xf32, #tpu.memory_space<vmem>>, %arg4: memref<4x512xf32, #tpu.memory_space<vmem>>) attributes {dimension_semantics = [#tpu.dimension_semantics<parallel>, #tpu.dimension_semantics<arbitrary>], iteration_bounds = array<i64: 1, 1>, scalar_prefetch = 0 : i64, scratch_operands = 0 : i64, tpu.core_type = #tpu.core_type<tc>, window_params = [{transform_indices = @transform_0, window_bounds = array<i64: 4, 512>}, {transform_indices = @transform_1, window_bounds = array<i64: 4, 512>}, {transform_indices = @transform_2, window_bounds = array<i64: 4, 512>}]} {
    %c0_i32 = arith.constant 0 : i32
    %0 = arith.cmpi eq, %arg1, %c0_i32 : i32
    %1 = arith.extui %0 : i1 to i32
    %c0_i32_0 = arith.constant 0 : i32
    %2 = arith.cmpi ne, %1, %c0_i32_0 : i32
    scf.if %2 {
      %cst_10 = arith.constant 0.000000e+00 : f32
      %18 = vector.broadcast %cst_10 : f32 to vector<4x512xf32>
      %c0_11 = arith.constant 0 : index
      %c0_12 = arith.constant 0 : index
      %19 = vector.load %arg4[%c0_11, %c0_12] : memref<4x512xf32, #tpu.memory_space<vmem>>, vector<4x512xf32>
      tpu.vector_store %arg4[%c0_11, %c0_12], %18 {strides = array<i32>} : memref<4x512xf32, #tpu.memory_space<vmem>>, vector<4x512xf32>,
    } else {
    }
    %c0 = arith.constant 0 : index
    %c0_1 = arith.constant 0 : index
    %3 = vector.load %arg2[%c0, %c0_1] : memref<4x512xf32, #tpu.memory_space<vmem>>, vector<4x512xf32>
    %4 = arith.negf %3 : vector<4x512xf32>
    %5 = math.exp %4 : vector<4x512xf32>
    %cst = arith.constant 1.000000e+00 : f32
    %6 = vector.broadcast %cst : f32 to vector<4x512xf32>
    %7 = arith.addf %6, %5 : vector<4x512xf32>
    %8 = arith.divf %6, %7 : vector<4x512xf32>
    %c0_2 = arith.constant 0 : index
    %c0_3 = arith.constant 0 : index
    %9 = vector.load %arg3[%c0_2, %c0_3] : memref<4x512xf32, #tpu.memory_space<vmem>>, vector<4x512xf32>
    tpu.vector_store %arg3[%c0_2, %c0_3], %8 {strides = array<i32>} : memref<4x512xf32, #tpu.memory_space<vmem>>, vector<4x512xf32>,
    %c0_4 = arith.constant 0 : index
    %c0_5 = arith.constant 0 : index
    %10 = vector.load %arg4[%c0_4, %c0_5] : memref<4x512xf32, #tpu.memory_space<vmem>>, vector<4x512xf32>
    %cst_6 = arith.constant 5.000000e-01 : f32
    %11 = vector.broadcast %cst_6 : f32 to vector<4x512xf32>
    %12 = arith.subf %8, %11 : vector<4x512xf32>
    %13 = math.absf %12 : vector<4x512xf32>
    %cst_7 = arith.constant 2.000000e+00 : f32
    %14 = vector.broadcast %cst_7 : f32 to vector<4x512xf32>
    %15 = arith.mulf %13, %14 : vector<4x512xf32>
    %16 = arith.addf %10, %15 : vector<4x512xf32>
    %c0_8 = arith.constant 0 : index
    %c0_9 = arith.constant 0 : index
    %17 = vector.load %arg4[%c0_8, %c0_9] : memref<4x512xf32, #tpu.memory_space<vmem>>, vector<4x512xf32>
    tpu.vector_store %arg4[%c0_8, %c0_9], %16 {strides = array<i32>} : memref<4x512xf32, #tpu.memory_space<vmem>>, vector<4x512xf32>,
    return
  }
  func.func @transform_0(%arg0: i32, %arg1: i32) -> (i32, i32) {
    %c1_i32 = arith.constant 1 : i32
    %0 = arith.muli %arg0, %c1_i32 : i32
    %1 = arith.addi %0, %arg1 : i32
    %c0_i32 = arith.constant 0 : i32
    %2 = arith.minsi %1, %c0_i32 : i32
    %c0_i32_0 = arith.constant 0 : i32
    %c0_i32_1 = arith.constant 0 : i32
    return %2, %c0_i32_0 : i32, i32
  }
  func.func @transform_1(%arg0: i32, %arg1: i32) -> (i32, i32) {
    %c1_i32 = arith.constant 1 : i32
    %0 = arith.muli %arg0, %c1_i32 : i32
    %1 = arith.addi %0, %arg1 : i32
    %c0_i32 = arith.constant 0 : i32
    %2 = arith.minsi %1, %c0_i32 : i32
    %c0_i32_0 = arith.constant 0 : i32
    %c0_i32_1 = arith.constant 0 : i32
    return %2, %c0_i32_0 : i32, i32
  }
  func.func @transform_2(%arg0: i32, %arg1: i32) -> (i32, i32) {
    %c0_i32 = arith.constant 0 : i32
    %c0_i32_0 = arith.constant 0 : i32
    return %arg0, %c0_i32 : i32, i32
  }
}

</mosaic_0001>

<llo_original>
// kernel: tpu_custom_call.1
$region0: #{tpu_custom_call.1}
  #allocation0 [shape = 'u32[]', space=smem, size = 0x4, offset = 0x4, fixed_abs, tag = 'smem constant byte address 0x4 - core index']
  #allocation1 [shape = 'u32[144,128]{1,0:T(1,128)}', space=vmem, size = 0x12000, scoped, tag = 'internal scratch']
  %s0 = inlined_call_operand.hbm [shape: f32[4,512], index: 0, kind: input, shape index: {}]
  %s1 = inlined_call_operand.hbm [shape: f32[4,512], index: 1, kind: output, shape index: {0}]
  %s2 = inlined_call_operand.hbm [shape: f32[4,512], index: 2, kind: output, shape index: {1}]
  %3 = xla_tuple %s1, %s2
  %s4 = sld [smem:[#allocation0]]
  $region30: #{tpu_custom_call.1} parent=0
    _
  %s6 = ssub.s32 1, %s4
  %s7 = scalar_select 0, %s6, %s4
  $region1: #{tpu_custom_call.1} parent=0
    #allocation2 [shape = 'u8[8192]{0}', space=vmem, size = 0x2000, scoped, tag = 'input window, operand 0, single buffered']
    #allocation3 [shape = 's32[1]{0}', space=sflag, size = 0x4, scoped, tag = 'scoped memory for tpu_custom_call.1']
    #allocation4 [shape = 's32[1]{0}', space=sflag, size = 0x4, scoped, tag = 'scoped memory for tpu_custom_call.1']
    #allocation5 [shape = 'u8[8192]{0}', space=vmem, size = 0x2000, scoped, tag = 'output window, operand 0, single buffered']
    #allocation6 [shape = 'u8[8192]{0}', space=vmem, size = 0x2000, scoped, tag = 'output window, operand 1, single buffered']
    #allocation7 [shape = 's32[1]{0}', space=sflag, size = 0x4, scoped, tag = 'scoped memory for tpu_custom_call.1']
    %8 = vsyncpa [#allocation3], 0
    %9 = vsyncpa [#allocation4], 0
    %10 = vsyncpa [#allocation7], 0
    // Predicated region
    $region2: #{tpu_custom_call.1} parent=1 // pred_check
      _
    $region3: #{tpu_custom_call.1} parent=1 // pred_check_branch
      %12 = sbr.rel (0) target = $region5
    $region4: #{tpu_custom_call.1} parent=1 // pred_region
      %s13 = sadd.s32 0, 0
      %p14 = scmp.lt.s32.totalorder %s13, 0
      %s15 = scalar_select %p14, %s13, 0
      %s17 = ssub.s32 256, 256
      %18 = vsyncadd [#allocation3], %s17
      %s19 = smul.addr %s15, 4
      %s20 = smul.addr %s19, 64
      %s21 = scalar_lea.hbm %s0, %s20
      %s23 = sshll.u32 [#allocation2], 4
      %s24 = int_to_ptr.vmem [resolvable:$true] %s23
      %26 = dma.hbm_to_vmem [thread:$0]  %s21, 256, %s24, [#allocation3]
    $region5: #{tpu_custom_call.1} parent=1 // pred_fallthru
      _
    // Predicated region
    $region6: #{tpu_custom_call.1} parent=1 // pred_check
      _
    $region7: #{tpu_custom_call.1} parent=1 // pred_check_branch
      %28 = sbr.rel (0) target = $region9
    $region8: #{tpu_custom_call.1} parent=1 // pred_region
      %29 = dma.done [#allocation3], 256
    $region9: #{tpu_custom_call.1} parent=1 // pred_fallthru
      _
    %s30 = sadd.s32 0, 0
    %p31 = scmp.lt.s32.totalorder %s30, 0
    %s32 = scalar_select %p31, %s30, 0
    %s33 = sadd.s32 0, 0
    %p34 = scmp.lt.s32.totalorder %s33, 0
    %s35 = scalar_select %p34, %s33, 0
    %p36 = scmp.eq.s32.totalorder 0, 0
    // Predicated region
    $region10: #{tpu_custom_call.1} parent=1 // pred_check
      %p37 = pneg %p36
    $region11: #{tpu_custom_call.1} parent=1 // pred_check_branch
      %39 = sbr.rel (%p37) target = $region13
    $region12: #{tpu_custom_call.1} parent=1 // pred_region
      %40 = vst [vmem:[#allocation6] sm:$0xff] 0.0
      %41 = vst [vmem:[#allocation6 + $0x8] sm:$0xff] 0.0
    $region13: #{tpu_custom_call.1} parent=1 // pred_fallthru
      _
    %v42 = vld [vmem:[#allocation2] sm:$0xff]
    %v43 = vld [vmem:[#allocation2 + $0x8] sm:$0xff]
    %v44 = vxor.u32 %v42, 2147483648
    %v45 = vxor.u32 %v43, 2147483648
    %v46 = vmul.f32 %v44, 1.442695
    %v47 = vpow.pop %v46
    %v48 = vmul.f32 %v45, 1.442695
    %v49 = vpow.pop %v48
    %v50 = vadd.f32 %v47, 1.0
    %v51 = vadd.f32 %v49, 1.0
    %v52 = vrcp.pop %v50
    %v53 = vmul.f32 1.0, %v52
    %v54 = vrcp.pop %v51
    %v55 = vmul.f32 1.0, %v54
    %56 = vst [vmem:[#allocation5] sm:$0xff] %v53
    %57 = vst [vmem:[#allocation5 + $0x8] sm:$0xff] %v55
    %v58 = vld [vmem:[#allocation6] sm:$0xff]
    %v59 = vld [vmem:[#allocation6 + $0x8] sm:$0xff]
    %v60 = vsub.f32 %v53, 0.5
    %v61 = vsub.f32 %v55, 0.5
    %v62 = vand.u32 2147483647, %v60
    %v63 = vand.u32 2147483647, %v61
    %v64 = vmul.f32 %v62, 2.0
    %v65 = vmul.f32 %v63, 2.0
    %v66 = vadd.f32 %v58, %v64
    %v67 = vadd.f32 %v59, %v65
    %68 = vst [vmem:[#allocation6] sm:$0xff] %v66
    %69 = vst [vmem:[#allocation6 + $0x8] sm:$0xff] %v67
    // Predicated region
    $region14: #{tpu_custom_call.1} parent=1 // pred_check
      _
    $region15: #{tpu_custom_call.1} parent=1 // pred_check_branch
      %71 = sbr.rel (0) target = $region17
    $region16: #{tpu_custom_call.1} parent=1 // pred_region
      %s72 = sadd.s32 0, 0
      %p73 = scmp.lt.s32.totalorder %s72, 0
      %s74 = scalar_select %p73, %s72, 0
      %s76 = ssub.s32 256, 256
      %77 = vsyncadd [#allocation4], %s76
      %s78 = smul.addr %s74, 4
      %s79 = smul.addr %s78, 64
      %s80 = scalar_lea.hbm %s1, %s79
      %s82 = sshll.u32 [#allocation5], 4
      %s83 = int_to_ptr.vmem [resolvable:$true] %s82
      %85 = dma.vmem_to_hbm [thread:$0]  %s83, 256, %s80, [#allocation4]
    $region17: #{tpu_custom_call.1} parent=1 // pred_fallthru
      _
    // Predicated region
    $region18: #{tpu_custom_call.1} parent=1 // pred_check
      _
    $region19: #{tpu_custom_call.1} parent=1 // pred_check_branch
      %87 = sbr.rel (0) target = $region21
    $region20: #{tpu_custom_call.1} parent=1 // pred_region
      %s89 = ssub.s32 256, 256
      %90 = vsyncadd [#allocation7], %s89
      %s92 = sshll.u32 [#allocation6], 4
      %s93 = int_to_ptr.vmem [resolvable:$true] %s92
      %95 = dma.vmem_to_hbm [thread:$0]  %s93, 256, %s2, [#allocation7]
    $region21: #{tpu_custom_call.1} parent=1 // pred_fallthru
      _
    // Predicated region
    $region22: #{tpu_custom_call.1} parent=1 // pred_check
      _
    $region23: #{tpu_custom_call.1} parent=1 // pred_check_branch
      %97 = sbr.rel (0) target = $region25
    $region24: #{tpu_custom_call.1} parent=1 // pred_region
      %98 = dma.done [#allocation4], 256
    $region25: #{tpu_custom_call.1} parent=1 // pred_fallthru
      _
    // Predicated region
    $region26: #{tpu_custom_call.1} parent=1 // pred_check
      _
    $region27: #{tpu_custom_call.1} parent=1 // pred_check_branch
      %100 = sbr.rel (0) target = $region29
    $region28: #{tpu_custom_call.1} parent=1 // pred_region
      %101 = dma.done [#allocation7], 256
    $region29: #{tpu_custom_call.1} parent=1 // pred_fallthru
      _
    %102 = vsyncpa [#allocation3], 1
    %103 = vsyncpa [#allocation4], 1
    %104 = vsyncpa [#allocation7], 1

</llo_original>
